<compile_context>
chip_gen: v5e
topology: v5e:2x2
jax: 0.10.0
libtpu: 0.0.40
codegen_flags: <defaults>
</compile_context>

<pallas_src>
import functools

import jax
import jax.numpy as jnp
import numpy as np
from jax.experimental import pallas as pl
from jax.experimental.pallas import tpu as pltpu


# --------------------------------------------------------------------------
# One-time probe of pltpu.roll direction (runs a tiny kernel eagerly).
# Used only on the host when folding the PA extraction into w1p.
# --------------------------------------------------------------------------
_ROLL_IS_JNP_LIKE = None


def _roll_probe_kernel(x_ref, o_ref):
    o_ref[...] = pltpu.roll(x_ref[...], 1, 1)


def _roll_matches_jnp_roll():
    """True iff pltpu.roll(x, s)[j] == x[(j - s) % N] (jnp.roll convention)."""
    global _ROLL_IS_JNP_LIKE
    if _ROLL_IS_JNP_LIKE is None:
        x = jnp.broadcast_to(jnp.arange(128, dtype=jnp.int32)[None, :], (8, 128))
        out = pl.pallas_call(
            _roll_probe_kernel,
            out_shape=jax.ShapeDtypeStruct((8, 128), jnp.int32),
        )(x)
        if int(out[0, 1]) == 0:
            _ROLL_IS_JNP_LIKE = True
        elif int(out[0, 0]) == 1:
            _ROLL_IS_JNP_LIKE = False
        else:  # pragma: no cover - defensive
            raise RuntimeError("unexpected pltpu.roll semantics")
    return _ROLL_IS_JNP_LIKE


# --------------------------------------------------------------------------
# Kernel
# --------------------------------------------------------------------------
def _paca_kernel(x_ref,
                 w1p_ref, b1p_ref, w2p_ref, b2p_ref,
                 w1c_ref, b1c_ref, w2c_ref, b2c_ref,
                 out_ref, *weight_refs, dim_pa, dim_ca):
    """x_ref/out_ref/(weight_ref): (TB, W*C) lane-dense slabs.

    Host-prepared params:
      w1p_ref: (W*C, Hp)  rows of the original (W,Hp) scattered to the clean
               per-group lane of the roll tree (extraction fused into matmul).
      w2p_ref: (Hp, W*C)  = w2p @ E_pa  (group-block one-hot expansion folded)
      w2c_ref: (Hc, W*C)  = w2c @ E_ca  (strided-identity expansion folded)
      b2p_ref/b2c_ref: (1, W*C) expanded biases; b1*_ref: (1, H*) unchanged.
      w1c_ref: (C, Hc) unchanged.
    """
    W, C = dim_pa, dim_ca
    x = x_ref[...].astype(jnp.float32)                       # (TB, W*C)

    # ---- y_ca = max over W : vreg-aligned halving tree (direction-free).
    t = x
    while t.shape[1] > C:
        half = t.shape[1] // 2
        t = jnp.maximum(t[:, :half], t[:, half:])
    y_ca = t                                                 # (TB, C)

    # ---- y_pa = max over C : intra-group roll tree.  After the tree the
    # true group max sits in one known lane per 32-lane group; that lane is
    # selected by the host-scattered rows of w1p_ref (no in-kernel gather).
    s = x
    shift = 1
    while shift < C:
        s = jnp.maximum(s, pltpu.roll(s, shift, 1))
        shift *= 2

    # ---- PALayer MLP (extraction fused into the first matmul) ----
    h_pa = jnp.maximum(
        jnp.dot(s, w1p_ref[...], preferred_element_type=jnp.float32)
        + b1p_ref[...], 0.0)                                 # (TB, Hp)
    pa_e = (jnp.dot(h_pa, w2p_ref[...], preferred_element_type=jnp.float32)
            + b2p_ref[...])                                  # (TB, W*C) expanded

    # ---- CALayer MLP ----
    h_ca = jnp.maximum(
        jnp.dot(y_ca, w1c_ref[...], preferred_element_type=jnp.float32)
        + b1c_ref[...], 0.0)                                 # (TB, Hc)
    ca_e = (jnp.dot(h_ca, w2c_ref[...], preferred_element_type=jnp.float32)
            + b2c_ref[...])                                  # (TB, W*C) expanded

    # ---- sigmoid(pa * ca) and gating, all lane-dense ----
    paca_w = jax.nn.sigmoid(pa_e * ca_e)                     # (TB, W*C)
    out_ref[...] = (x * paca_w).astype(out_ref.dtype)
    if weight_refs:
        weight_refs[0][...] = paca_w.astype(weight_refs[0].dtype)


# --------------------------------------------------------------------------
# Host-side parameter preparation (extraction + expansion folding).
# Call once, outside jit (it runs the roll-direction probe).
# --------------------------------------------------------------------------
def prepare_params(params, dim_pa, dim_ca):
    W, C = dim_pa, dim_ca
    WC = W * C
    f32 = jnp.float32

    # Lane that holds the true per-group max after the in-kernel roll tree.
    off = (C - 1) if _roll_matches_jnp_roll() else 0

    w1p = params["w1p"].astype(f32)      # (W, Hp)
    b1p = params["b1p"].astype(f32)      # (1, Hp)
    w2p = params["w2p"].astype(f32)      # (Hp, W)
    b2p = params["b2p"].astype(f32)      # (1, W)
    w1c = params["w1c"].astype(f32)      # (C, Hc)
    b1c = params["b1c"].astype(f32)      # (1, Hc)
    w2c = params["w2c"].astype(f32)      # (Hc, C)
    b2c = params["b2c"].astype(f32)      # (1, C)
    hp = w1p.shape[1]

    # PA extraction fused into the first layer: row w of w1p goes to lane w*C+off.
    w1p_big = jnp.zeros((WC, hp), f32).at[off::C, :].set(w1p)

    # Outer-product expansion folded into the second layers.
    #   pa_expanded[:, w*C + c] = pa[:, w]  ->  E_pa[w, w*C:(w+1)*C] = 1
    #   ca_expanded[:, w*C + c] = ca[:, c]  ->  E_ca[c, w*C + c]     = 1
    e_pa = jnp.repeat(jnp.eye(W, dtype=f32), C, axis=1)      # (W, W*C)
    e_ca = jnp.tile(jnp.eye(C, dtype=f32), (1, W))           # (C, W*C)

    return {
        "w1p": w1p_big, "b1p": b1p,
        "w2p": w2p @ e_pa, "b2p": b2p @ e_pa,
        "w1c": w1c, "b1c": b1c,
        "w2c": w2c @ e_ca, "b2c": b2c @ e_ca,
    }


# --------------------------------------------------------------------------
# Wrapper
# --------------------------------------------------------------------------
def _pick_block_b(batch, row_elems, n_big_streams, itemsize):
    """Batch rows per grid step: biggest tile that fits a ~24 MiB VMEM budget
    (double-buffered streams + in-kernel f32 temps), preferring a divisor of
    the batch so no ragged tail block is needed.  No >=2-step clamp: on
    single-TC chips (v5e/v6e) the largest tile wins; on v7x the grid is still
    shared across cores whenever it has >1 step."""
    sub = max(8, 32 // max(1, itemsize))          # f32:8, bf16:16, int8:32
    budget = 24 * 1024 * 1024
    denom = row_elems * (n_big_streams * 2 * itemsize + 6 * 4)
    tb = max(sub, min(512, budget // max(1, denom)))
    tb = (tb // sub) * sub
    if batch <= tb:
        return batch                               # single block == full batch
    best = tb
    for cand in range(tb, max(sub, tb // 2) - 1, -sub):
        if batch % cand == 0:
            best = cand
            break
    return best


def paca_layer(x, prepped, *, return_weight=True, block_b=None):
    """x: (B, W, C) with W == dim_pa, C == dim_ca.  `prepped` from prepare_params.

    Returns (out, paca_normal_weight) if return_weight else just out,
    matching the PyTorch PACALayer.forward semantics.
    """
    B, W, C = x.shape
    WC = W * C
    assert W & (W - 1) == 0 and C & (C - 1) == 0, \
        "this kernel specialization needs power-of-two dim_pa / dim_ca"

    plist = [prepped[k] for k in
             ("w1p", "b1p", "w2p", "b2p", "w1c", "b1c", "w2c", "b2c")]

    n_streams = 3 if return_weight else 2                    # x + out (+ weight)
    if block_b is None:
        block_b = _pick_block_b(B, WC, n_streams, x.dtype.itemsize)

    # Lane-dense view: each batch row is one contiguous (W*C,) slab.
    x_flat = x.reshape(B, WC)
    num_blocks = pl.cdiv(B, block_b)

    slab_spec = pl.BlockSpec((block_b, WC), lambda i: (i, 0))
    param_specs = [pl.BlockSpec(p.shape, lambda i: (0, 0)) for p in plist]

    out_shapes = [jax.ShapeDtypeStruct((B, WC), x.dtype)]
    out_specs = [slab_spec]
    if return_weight:
        out_shapes.append(jax.ShapeDtypeStruct((B, WC), x.dtype))
        out_specs.append(slab_spec)

    kernel = functools.partial(_paca_kernel, dim_pa=W, dim_ca=C)

    results = pl.pallas_call(
        kernel,
        out_shape=tuple(out_shapes),
        grid_spec=pltpu.PrefetchScalarGridSpec(
            num_scalar_prefetch=0,
            grid=(num_blocks,),
            in_specs=[slab_spec] + param_specs,
            out_specs=tuple(out_specs),
        ),
        compiler_params=pltpu.CompilerParams(
            dimension_semantics=("parallel",),
            vmem_limit_bytes=32 * 1024 * 1024),
    )(x_flat, *plist)

    out = results[0].reshape(B, W, C)
    if return_weight:
        return out, results[1].reshape(B, W, C)
    return out


# --------------------------------------------------------------------------
# Reference + parameter construction (mirrors the PyTorch module)
# --------------------------------------------------------------------------
def paca_reference(x, p):
    y_pa = jnp.max(x, axis=2)                                 # (B, W)
    pa = jnp.maximum(y_pa @ p["w1p"] + p["b1p"], 0.0) @ p["w2p"] + p["b2p"]
    y_ca = jnp.max(x, axis=1)                                 # (B, C)
    ca = jnp.maximum(y_ca @ p["w1c"] + p["b1c"], 0.0) @ p["w2c"] + p["b2c"]
    w = jax.nn.sigmoid(pa[:, :, None] * ca[:, None, :])       # (B, W, C)
    return x * w, w


def make_params(key, dim_pa, dim_ca, reduction_r):
    # Mirrors PACALayer.__init__:
    #   PALayer(dim_pa, dim_pa // reduction_r) -> hidden_pa = dim_pa // (dim_pa // reduction_r)
    #   CALayer(dim_ca, dim_ca // reduction_r) -> hidden_ca = dim_ca // (dim_ca // reduction_r)
    red_pa = dim_pa // reduction_r
    red_ca = dim_ca // reduction_r
    hid_pa = dim_pa // red_pa
    hid_ca = dim_ca // red_ca
    ks = jax.random.split(key, 8)
    s = 0.1
    return {
        "w1p": s * jax.random.normal(ks[0], (dim_pa, hid_pa), jnp.float32),
        "b1p": s * jax.random.normal(ks[1], (1, hid_pa), jnp.float32),
        "w2p": s * jax.random.normal(ks[2], (hid_pa, dim_pa), jnp.float32),
        "b2p": s * jax.random.normal(ks[3], (1, dim_pa), jnp.float32),
        "w1c": s * jax.random.normal(ks[4], (dim_ca, hid_ca), jnp.float32),
        "b1c": s * jax.random.normal(ks[5], (1, hid_ca), jnp.float32),
        "w2c": s * jax.random.normal(ks[6], (hid_ca, dim_ca), jnp.float32),
        "b2c": s * jax.random.normal(ks[7], (1, dim_ca), jnp.float32),
    }


if __name__ == "__main__":
    B, W, C = 16, 16, 32          # batch, dim_pa, dim_ca
    reduction_r = 4

    key = jax.random.PRNGKey(0)
    k_x, k_p = jax.random.split(key)
    x = jax.random.normal(k_x, (B, W, C), jnp.float32)
    params = make_params(k_p, dim_pa=W, dim_ca=C, reduction_r=reduction_r)
    prepped = prepare_params(params, dim_pa=W, dim_ca=C)

    # Full module semantics: (out, paca_normal_weight).
    out, paca_w = paca_layer(x, prepped)
    out = jax.block_until_ready(out)
    paca_w = jax.block_until_ready(paca_w)

    # Bandwidth-saving path: only `out` (one output stream).
    out_only = jax.block_until_ready(paca_layer(x, prepped, return_weight=False))

    # Multi-block grid path (exercises pipelining across batch tiles).
    out_mb, paca_w_mb = paca_layer(x, prepped, block_b=8)
    out_mb = jax.block_until_ready(out_mb)

    ref_out, ref_w = paca_reference(x, params)
    np.testing.assert_allclose(np.asarray(out), np.asarray(ref_out),
                               rtol=1e-5, atol=1e-5)
    np.testing.assert_allclose(np.asarray(paca_w), np.asarray(ref_w),
                               rtol=1e-5, atol=1e-5)
    np.testing.assert_allclose(np.asarray(out_only), np.asarray(ref_out),
                               rtol=1e-5, atol=1e-5)
    np.testing.assert_allclose(np.asarray(out_mb), np.asarray(ref_out),
                               rtol=1e-5, atol=1e-5)
    np.testing.assert_allclose(np.asarray(paca_w_mb), np.asarray(ref_w),
                               rtol=1e-5, atol=1e-5)

    print("KERNEL_OK")
</pallas_src>

<mosaic_0001>
module attributes {stable_mosaic.version = 11 : i64} {
  func.func @_roll_probe_kernel(%arg0: memref<8x128xi32, #tpu.memory_space<vmem>>, %arg1: memref<8x128xi32, #tpu.memory_space<vmem>>) attributes {dimension_semantics = [], scalar_prefetch = 0 : i64, scratch_operands = 0 : i64, tpu.core_type = #tpu.core_type<tc>} {
    %c0 = arith.constant 0 : index
    %c0_0 = arith.constant 0 : index
    %0 = vector.load %arg0[%c0, %c0_0] : memref<8x128xi32, #tpu.memory_space<vmem>>, vector<8x128xi32>
    %c1_i32 = arith.constant 1 : i32
    %1 = tpu.dynamic_rotate %0 by %c1_i32 dim 1 : vector<8x128xi32>, i32 -> vector<8x128xi32>
    %c0_1 = arith.constant 0 : index
    %c0_2 = arith.constant 0 : index
    %2 = vector.load %arg1[%c0_1, %c0_2] : memref<8x128xi32, #tpu.memory_space<vmem>>, vector<8x128xi32>
    tpu.vector_store %arg1[%c0_1, %c0_2], %1 {strides = array<i32>} : memref<8x128xi32, #tpu.memory_space<vmem>>, vector<8x128xi32>,
    return
  }
}

</mosaic_0001>

<llo_original>
// kernel: tpu_custom_call.1
$region0: #{tpu_custom_call.1}
  #allocation0 [shape = 'u32[]', space=smem, size = 0x4, offset = 0x4, fixed_abs, tag = 'smem constant byte address 0x4 - core index']
  #allocation1 [shape = 'u32[72,128]{1,0:T(1,128)}', space=vmem, size = 0x9000, scoped, tag = 'internal scratch']
  %s0 = inlined_call_operand.hbm [shape: s32[8,128], index: 0, kind: input, shape index: {}]
  %s1 = inlined_call_operand.hbm [shape: s32[8,128], index: 1, kind: output, shape index: {}]
  %s2 = sld [smem:[#allocation0]]
  $region18: #{tpu_custom_call.1} parent=0
    _
  %s4 = ssub.s32 1, %s2
  %s5 = scalar_select 0, %s4, %s2
  $region1: #{tpu_custom_call.1} parent=0
    #allocation2 [shape = 'u8[4096]{0}', space=vmem, size = 0x1000, scoped, tag = 'input window, operand 0, single buffered']
    #allocation3 [shape = 's32[1]{0}', space=sflag, size = 0x4, scoped, tag = 'scoped memory for tpu_custom_call.1']
    #allocation4 [shape = 's32[1]{0}', space=sflag, size = 0x4, scoped, tag = 'scoped memory for tpu_custom_call.1']
    #allocation5 [shape = 'u8[4096]{0}', space=vmem, size = 0x1000, scoped, tag = 'output window, operand 0, single buffered']
    %6 = vsyncpa [#allocation3], 0
    %7 = vsyncpa [#allocation4], 0
    // Predicated region
    $region2: #{tpu_custom_call.1} parent=1 // pred_check
      _
    $region3: #{tpu_custom_call.1} parent=1 // pred_check_branch
      %9 = sbr.rel (0) target = $region5
    $region4: #{tpu_custom_call.1} parent=1 // pred_region
      %11 = vsyncadd [#allocation3], 0
      %s13 = sshll.u32 %s0, 4
      %s14 = int_to_ptr.hbm [resolvable:$true] %s13
      %s15 = sshll.u32 [#allocation2], 4
      %s16 = int_to_ptr.vmem [resolvable:$true] %s15
      %18 = dma.hbm_to_vmem [thread:$0]  %s14, 128, %s16, [#allocation3]
    $region5: #{tpu_custom_call.1} parent=1 // pred_fallthru
      _
    // Predicated region
    $region6: #{tpu_custom_call.1} parent=1 // pred_check
      _
    $region7: #{tpu_custom_call.1} parent=1 // pred_check_branch
      %20 = sbr.rel (0) target = $region9
    $region8: #{tpu_custom_call.1} parent=1 // pred_region
      %22 = dma.done [#allocation3], 128
    $region9: #{tpu_custom_call.1} parent=1 // pred_fallthru
      _
    %v23 = vld [vmem:[#allocation2] sm:$0xff]
    %24 = vrot.lane.b32.xlu0 %v23, 1
    %v25 = vpop.permute.xlu0 %24
    %26 = vst [vmem:[#allocation5] sm:$0xff] %v25
    // Predicated region
    $region10: #{tpu_custom_call.1} parent=1 // pred_check
      _
    $region11: #{tpu_custom_call.1} parent=1 // pred_check_branch
      %28 = sbr.rel (0) target = $region13
    $region12: #{tpu_custom_call.1} parent=1 // pred_region
      %30 = vsyncadd [#allocation4], 0
      %s32 = sshll.u32 [#allocation5], 4
      %s33 = int_to_ptr.vmem [resolvable:$true] %s32
      %s34 = sshll.u32 %s1, 4
      %s35 = int_to_ptr.hbm [resolvable:$true] %s34
      %37 = dma.vmem_to_hbm [thread:$0]  %s33, 128, %s35, [#allocation4]
    $region13: #{tpu_custom_call.1} parent=1 // pred_fallthru
      _
    // Predicated region
    $region14: #{tpu_custom_call.1} parent=1 // pred_check
      _
    $region15: #{tpu_custom_call.1} parent=1 // pred_check_branch
      %39 = sbr.rel (0) target = $region17
    $region16: #{tpu_custom_call.1} parent=1 // pred_region
      %41 = dma.done [#allocation4], 128
    $region17: #{tpu_custom_call.1} parent=1 // pred_fallthru
      _
    %42 = vsyncpa [#allocation3], 1
    %43 = vsyncpa [#allocation4], 1

</llo_original>
